<compile_context>
chip_gen: v7x
topology: tpu7x:2x2x1
jax: 0.10.0
libtpu: 0.0.40
codegen_flags: <defaults>
</compile_context>

<pallas_src>
import jax
import jax.numpy as jnp
from jax.experimental import pallas as pl
from jax.experimental.pallas import tpu as pltpu


# ----------------------------------------------------------------------------
# 1. PlantModel forward head: global avg pool + (eval) dropout + linear logits
# ----------------------------------------------------------------------------
def _plant_head_kernel(feat_ref, w_ref, b_ref, out_ref):
    # feat_ref: (B, F, H*W); w_ref: (F, num_classes); b_ref: (1, num_classes)
    feat = feat_ref[...].astype(jnp.float32)
    pooled = jnp.mean(feat, axis=-1)                      # adaptive_avg_pool2d(x, 1)
    # dropout(p=0.25, training=False) == identity at inference.
    logits = jnp.dot(pooled, w_ref[...].astype(jnp.float32),
                     precision=jax.lax.Precision.HIGHEST,
                     preferred_element_type=jnp.float32)
    out_ref[...] = (logits + b_ref[...]).astype(out_ref.dtype)


def plant_head_forward(feat, weight, bias):
    """feat: (B, F, H, W) backbone features; weight: (C, F); bias: (C,) -> (B, C) logits."""
    B, F_, H, W = feat.shape
    num_classes = weight.shape[0]
    feat3 = feat.reshape(B, F_, H * W)
    w_t = jnp.transpose(weight)                # (F, num_classes)
    b2d = bias.reshape(1, num_classes)
    # Tiny shapes: whole arrays resident in VMEM, no grid needed.
    return pl.pallas_call(
        _plant_head_kernel,
        out_shape=jax.ShapeDtypeStruct((B, num_classes), jnp.float32),
    )(feat3, w_t, b2d)


# ----------------------------------------------------------------------------
# 2. DenseCrossEntropy loss (the reviewed kernel)
# ----------------------------------------------------------------------------
def _dense_ce_kernel(logits_ref, labels_ref, loss_ref):
    """Per batch-tile soft-label CE; per-row losses written as a (tile, 1) column.

    Numerically-stable form (subtract before the multiply-reduce):
        logZ     = max(x) + log(sum_c exp(x_c - max(x)))
        loss_row = sum_c y_c * (logZ - x_c)
    One XLU lane reduction (the max); both lane sums go to the idle MXU as
    (tile, C) @ (C, 1) matvecs in HIGHEST precision.
    """
    x = logits_ref[...].astype(jnp.float32)        # (tb, C)
    y = labels_ref[...].astype(jnp.float32)        # (tb, C)
    ones = jnp.ones((x.shape[-1], 1), jnp.float32)

    m = jnp.max(x, axis=-1, keepdims=True)                              # XLU
    se = jnp.dot(jnp.exp(x - m), ones,                                  # MXU sum
                 precision=jax.lax.Precision.HIGHEST,
                 preferred_element_type=jnp.float32)
    logz = m + jnp.log(se)                                              # (tb, 1)
    loss_ref[...] = jnp.dot(y * (logz - x), ones,                       # MXU sum
                            precision=jax.lax.Precision.HIGHEST,
                            preferred_element_type=jnp.float32)


def _round_up(x: int, m: int) -> int:
    return (x + m - 1) // m * m


def _round_down_min(x: int, m: int) -> int:
    return max(m, (x // m) * m)


_TILE_VMEM_BUDGET = 16 << 20   # per-tile working-set budget -> few-MiB HBM windows
_MAX_TILE_ROWS = 1024          # 512-1024 rows already ~85% of HBM roofline
_MIN_GRID_STEPS = 4            # pipeline depth + v7x dual-TC sharding


def _sublane_align(*dtypes) -> int:
    # f32 packs 8 rows/vreg, bf16 16, int8/fp8 32: align to the tightest
    # packing among the inputs so bf16 tiles aren't half-padded.
    min_itemsize = min(jnp.dtype(d).itemsize for d in dtypes)
    return max(8, 32 // max(min_itemsize, 1))


def _choose_batch_tile(B: int, C: int, itemsizes, align: int) -> int:
    # Per-row VMEM bytes: double-buffered native-dtype windows for BOTH inputs
    # plus ~4 f32 (tile, C) temporaries (x/y upcasts, exp, weighted log-probs).
    per_row = C * (2 * sum(itemsizes) + 4 * 4)
    tile = _TILE_VMEM_BUDGET // max(per_row, 1)
    tile = max(align, min(int(tile), _MAX_TILE_ROWS))
    # Keep the grid >= _MIN_GRID_STEPS steps when the batch allows it (no
    # single-tile fast path): overlap DMA with compute, let v7x use both TCs.
    if B >= _MIN_GRID_STEPS * align:
        tile = min(tile, _round_down_min(B // _MIN_GRID_STEPS, align))
    tile = min(tile, _round_up(B, align))      # never bigger than padded batch
    return _round_down_min(tile, align)


def dense_cross_entropy(logits, labels, *, batch_tile=None, min_classes_for_pallas=64):
    """Soft-label cross entropy, mean over batch (PyTorch DenseCrossEntropy).

    Inputs are consumed in their native dtype and upcast to f32 inside the
    kernel: feed bf16 logits/labels to halve HBM traffic (biggest lever on
    v5e's ~0.82 TB/s HBM); accumulation stays f32.
    """
    assert logits.shape == labels.shape and logits.ndim == 2
    B, C = logits.shape

    if batch_tile is None and C < min_classes_for_pallas:
        # Tiny class dims (e.g. PlantModel's 4 classes): each vreg would carry
        # only C useful lanes and launch/step overhead dominates — XLA fusion
        # wins, so skip Pallas here (per review).
        xf = logits.astype(jnp.float32)
        yf = labels.astype(jnp.float32)
        return jnp.mean(jnp.sum(-yf * jax.nn.log_softmax(xf, axis=-1), axis=-1))

    align = _sublane_align(logits.dtype, labels.dtype)
    itemsizes = (jnp.dtype(logits.dtype).itemsize, jnp.dtype(labels.dtype).itemsize)
    if batch_tile is None:
        batch_tile = _choose_batch_tile(B, C, itemsizes, align)
    else:
        batch_tile = int(batch_tile)
        batch_tile = max(align, min(_round_down_min(batch_tile, align),
                                    _round_up(B, align)))

    # Pad the batch so the grid divides evenly; padded rows have all-zero
    # labels -> exactly zero loss contribution.
    Bp = _round_up(B, batch_tile)
    if Bp != B:
        pad = Bp - B
        logits = jnp.pad(logits, ((0, pad), (0, 0)))
        labels = jnp.pad(labels, ((0, pad), (0, 0)))

    grid = (Bp // batch_tile,)

    # Output stays a (Bp, 1) column: it is tiny; a lane-dense (num_tiles, tile)
    # layout is a possible refinement only for very long grids (low priority).
    per_row = pl.pallas_call(
        _dense_ce_kernel,
        out_shape=jax.ShapeDtypeStruct((Bp, 1), jnp.float32),
        grid_spec=pltpu.PrefetchScalarGridSpec(
            num_scalar_prefetch=0,
            grid=grid,
            in_specs=[
                pl.BlockSpec((batch_tile, C), lambda i: (i, 0)),
                pl.BlockSpec((batch_tile, C), lambda i: (i, 0)),
            ],
            out_specs=pl.BlockSpec((batch_tile, 1), lambda i: (i, 0)),
        ),
        compiler_params=pltpu.CompilerParams(
            # Independent tiles: megacore sharding on v7x, pipelined everywhere.
            dimension_semantics=("parallel",),
            # Fixed, generation-agnostic limit: < 64 MiB per-TC VMEM on v7x,
            # ample headroom over the few-MiB double-buffered windows.
            vmem_limit_bytes=48 << 20,
        ),
    )(logits, labels)

    # Final mean in the wrapper (padded rows contribute 0; divide by true B).
    return jnp.sum(per_row) / jnp.float32(B)


if __name__ == "__main__":
    key = jax.random.PRNGKey(0)
    k1, k2, k3, k4, k5 = jax.random.split(key, 5)

    # ---- PlantModel head forward: backbone features -> 4-class logits ----
    B, F_feat, H, W = 2, 32, 8, 8
    NUM_CLASSES = 4
    feats = jax.random.normal(k1, (B, F_feat, H, W), dtype=jnp.float32)
    w = 0.05 * jax.random.normal(k2, (NUM_CLASSES, F_feat), dtype=jnp.float32)
    b = 0.05 * jax.random.normal(k3, (NUM_CLASSES,), dtype=jnp.float32)

    head_logits = jax.block_until_ready(plant_head_forward(feats, w, b))
    head_ref = jnp.mean(feats.reshape(B, F_feat, H * W), axis=-1) @ w.T + b
    assert jnp.allclose(head_logits, head_ref, rtol=1e-5, atol=1e-5), (head_logits, head_ref)

    # ---- DenseCrossEntropy kernel: C=128 exercises the Pallas path ----
    Bce, Cce = 64, 128
    logits = jax.random.normal(k4, (Bce, Cce), dtype=jnp.float32)
    label_ids = jax.random.randint(k5, (Bce,), 0, Cce)
    labels = jax.nn.one_hot(label_ids, Cce, dtype=jnp.float32)

    ref = jnp.mean(jnp.sum(-labels * jax.nn.log_softmax(logits, axis=-1), axis=-1))

    loss_auto = jax.block_until_ready(dense_cross_entropy(logits, labels))       # auto tile: 4-step grid
    loss_tiled = jax.block_until_ready(dense_cross_entropy(logits, labels, batch_tile=8))

    # bf16 ingestion path: half the HBM bytes, f32 math inside the kernel.
    lb = logits.astype(jnp.bfloat16)
    yb = labels.astype(jnp.bfloat16)
    ref_bf16 = jnp.mean(jnp.sum(
        -yb.astype(jnp.float32) * jax.nn.log_softmax(lb.astype(jnp.float32), axis=-1),
        axis=-1))
    loss_bf16 = jax.block_until_ready(dense_cross_entropy(lb, yb))

    # PlantModel's own 4-class loss: tiny C -> deliberately routed to XLA fusion.
    labels4 = jax.nn.one_hot(jnp.array([1, 3]), NUM_CLASSES, dtype=jnp.float32)
    loss_small = jax.block_until_ready(dense_cross_entropy(head_logits, labels4))
    ref_small = jnp.mean(jnp.sum(-labels4 * jax.nn.log_softmax(head_logits, axis=-1), axis=-1))

    assert jnp.allclose(loss_auto, ref, rtol=1e-5, atol=1e-5), (loss_auto, ref)
    assert jnp.allclose(loss_tiled, ref, rtol=1e-5, atol=1e-5), (loss_tiled, ref)
    assert jnp.allclose(loss_bf16, ref_bf16, rtol=1e-4, atol=1e-4), (loss_bf16, ref_bf16)
    assert jnp.allclose(loss_small, ref_small, rtol=1e-5, atol=1e-5), (loss_small, ref_small)

    print("KERNEL_OK")
</pallas_src>

<mosaic_0001>
module attributes {stable_mosaic.version = 11 : i64} {
  func.func @_plant_head_kernel(%arg0: memref<2x32x64xf32, #tpu.memory_space<vmem>>, %arg1: memref<32x4xf32, #tpu.memory_space<vmem>>, %arg2: memref<1x4xf32, #tpu.memory_space<vmem>>, %arg3: memref<2x4xf32, #tpu.memory_space<vmem>>) attributes {dimension_semantics = [], scalar_prefetch = 0 : i64, scratch_operands = 0 : i64, tpu.core_type = #tpu.core_type<tc>} {
    %c0 = arith.constant 0 : index
    %c0_0 = arith.constant 0 : index
    %c0_1 = arith.constant 0 : index
    %0 = vector.load %arg0[%c0, %c0_0, %c0_1] : memref<2x32x64xf32, #tpu.memory_space<vmem>>, vector<2x32x64xf32>
    %cst = arith.constant dense<0.000000e+00> : vector<2x32xf32>
    %1 = vector.multi_reduction <add>, %0, %cst [2] : vector<2x32x64xf32> to vector<2x32xf32>
    %cst_2 = arith.constant 6.400000e+01 : f32
    %2 = vector.broadcast %cst_2 : f32 to vector<2x32xf32>
    %3 = arith.divf %1, %2 : vector<2x32xf32>
    %c0_3 = arith.constant 0 : index
    %c0_4 = arith.constant 0 : index
    %4 = vector.load %arg1[%c0_3, %c0_4] : memref<32x4xf32, #tpu.memory_space<vmem>>, vector<32x4xf32>
    %cst_5 = arith.constant dense<0.000000e+00> : vector<2x4xf32>
    %5 = tpu.matmul %3, %4, %cst_5 {dimension_numbers = #tpu.dot_dimension_numbers<[1], [0], [0], [1], [0, 0, 1, 1], [], []>, precision = #tpu.contract_precision<fp32>} : vector<2x32xf32>, vector<32x4xf32>, vector<2x4xf32> -> vector<2x4xf32>
    %c0_6 = arith.constant 0 : index
    %c0_7 = arith.constant 0 : index
    %6 = vector.load %arg2[%c0_6, %c0_7] : memref<1x4xf32, #tpu.memory_space<vmem>>, vector<1x4xf32>
    %7 = vector.broadcast %6 : vector<1x4xf32> to vector<2x4xf32>
    %8 = arith.addf %5, %7 : vector<2x4xf32>
    %c0_8 = arith.constant 0 : index
    %c0_9 = arith.constant 0 : index
    %9 = vector.load %arg3[%c0_8, %c0_9] : memref<2x4xf32, #tpu.memory_space<vmem>>, vector<2x4xf32>
    tpu.vector_store %arg3[%c0_8, %c0_9], %8 {strides = array<i32>} : memref<2x4xf32, #tpu.memory_space<vmem>>, vector<2x4xf32>,
    return
  }
}

</mosaic_0001>

<llo_original>
// kernel: tpu_custom_call.1
$region0: #{tpu_custom_call.1}
  #allocation0 [shape = 'u32[]', space=smem, size = 0x4, offset = 0x4, fixed_abs, tag = 'smem constant byte address 0x4 - core index']
  #allocation1 [shape = 'u32[144,128]{1,0:T(1,128)}', space=vmem, size = 0x12000, scoped, tag = 'internal scratch']
  %s0 = inlined_call_operand.hbm [shape: f32[2,32,64], index: 0, kind: input, shape index: {}]
  %s1 = inlined_call_operand.vmem [shape: f32[32,4], index: 1, kind: input, shape index: {}]
  %s2 = inlined_call_operand.vmem [shape: f32[1,4], index: 2, kind: input, shape index: {}]
  %s3 = inlined_call_operand.hbm [shape: f32[2,4], index: 3, kind: output, shape index: {}]
  %s4 = sld [smem:[#allocation0]]
  $region26: #{tpu_custom_call.1} parent=0
    _
  %s6 = ssub.s32 1, %s4
  %s7 = scalar_select 0, %s6, %s4
  $region1: #{tpu_custom_call.1} parent=0
    #allocation2 [shape = 'u8[32768]{0}', space=vmem, size = 0x8000, scoped, tag = 'input window, operand 0, single buffered']
    #allocation3 [shape = 's32[1]{0}', space=sflag, size = 0x4, scoped, tag = 'scoped memory for tpu_custom_call.1']
    #allocation4 [shape = 's32[1]{0}', space=sflag, size = 0x4, scoped, tag = 'scoped memory for tpu_custom_call.1']
    #allocation5 [shape = 'u8[1024]{0}', space=vmem, size = 0x400, scoped, tag = 'output window, operand 0, single buffered']
    %8 = vsyncpa [#allocation3], 0
    %9 = vsyncpa [#allocation4], 0
    // Predicated region
    $region2: #{tpu_custom_call.1} parent=1 // pred_check
      _
    $region3: #{tpu_custom_call.1} parent=1 // pred_check_branch
      %11 = sbr.rel (0) target = $region5
    $region4: #{tpu_custom_call.1} parent=1 // pred_region
      %s13 = ssub.s32 1024, 1024
      %14 = vsyncadd [#allocation3], %s13
      %s15 = sshll.u32 [#allocation2], 4
      %s16 = int_to_ptr.vmem [resolvable:$true] %s15
      %21 = dma.hbm_to_vmem [thread:$0]  %s0, 1024, %s16, [#allocation3], 128, 128, 8
    $region5: #{tpu_custom_call.1} parent=1 // pred_fallthru
      _
    // Predicated region
    $region6: #{tpu_custom_call.1} parent=1 // pred_check
      _
    $region7: #{tpu_custom_call.1} parent=1 // pred_check_branch
      %23 = sbr.rel (0) target = $region9
    $region8: #{tpu_custom_call.1} parent=1 // pred_region
      _
    $region9: #{tpu_custom_call.1} parent=1 // pred_fallthru
      _
    // Predicated region
    $region10: #{tpu_custom_call.1} parent=1 // pred_check
      _
    $region11: #{tpu_custom_call.1} parent=1 // pred_check_branch
      %25 = sbr.rel (0) target = $region13
    $region12: #{tpu_custom_call.1} parent=1 // pred_region
      _
    $region13: #{tpu_custom_call.1} parent=1 // pred_fallthru
      _
    // Predicated region
    $region14: #{tpu_custom_call.1} parent=1 // pred_check
      _
    $region15: #{tpu_custom_call.1} parent=1 // pred_check_branch
      %27 = sbr.rel (0) target = $region17
    $region16: #{tpu_custom_call.1} parent=1 // pred_region
      %28 = dma.done [#allocation3], 1024
    $region17: #{tpu_custom_call.1} parent=1 // pred_fallthru
      _
    %v29 = vld [vmem:[#allocation2] sm:$0xff]
    %v30 = vld [vmem:[#allocation2 + $0x8] sm:$0xff]
    %v31 = vld [vmem:[#allocation2 + $0x10] sm:$0xff]
    %v32 = vld [vmem:[#allocation2 + $0x18] sm:$0xff]
    %v33 = vld [vmem:[#allocation2 + $0x20] sm:$0xff]
    %v34 = vld [vmem:[#allocation2 + $0x28] sm:$0xff]
    %v35 = vld [vmem:[#allocation2 + $0x30] sm:$0xff]
    %v36 = vld [vmem:[#allocation2 + $0x38] sm:$0xff]
    %vm37 = vcmask 523264
    %v38 = vsel %vm37, %v29, 0.0
    %39 = vadd.xlane.f32.xlu0 %v38
    %v40 = vpop.xlane.xlu0 %39
    %v41 = vsel %vm37, %v30, 0.0
    %42 = vadd.xlane.f32.xlu0 %v41
    %v43 = vpop.xlane.xlu0 %42
    %v44 = vsel %vm37, %v31, 0.0
    %45 = vadd.xlane.f32.xlu0 %v44
    %v46 = vpop.xlane.xlu0 %45
    %v47 = vsel %vm37, %v32, 0.0
    %48 = vadd.xlane.f32.xlu0 %v47
    %v49 = vpop.xlane.xlu0 %48
    %v50 = vsel %vm37, %v33, 0.0
    %51 = vadd.xlane.f32.xlu0 %v50
    %v52 = vpop.xlane.xlu0 %51
    %v53 = vsel %vm37, %v34, 0.0
    %54 = vadd.xlane.f32.xlu0 %v53
    %v55 = vpop.xlane.xlu0 %54
    %v56 = vsel %vm37, %v35, 0.0
    %57 = vadd.xlane.f32.xlu0 %v56
    %v58 = vpop.xlane.xlu0 %57
    %v59 = vsel %vm37, %v36, 0.0
    %60 = vadd.xlane.f32.xlu0 %v59
    %v61 = vpop.xlane.xlu0 %60
    %v62 = vrcp.pop 64.0
    %v63 = vmul.f32 %v40, %v62
    %v64 = vmul.f32 %v43, %v62
    %v65 = vmul.f32 %v46, %v62
    %v66 = vmul.f32 %v49, %v62
    %v67 = vmul.f32 %v52, %v62
    %v68 = vmul.f32 %v55, %v62
    %v69 = vmul.f32 %v58, %v62
    %v70 = vmul.f32 %v61, %v62
    %v71 = vld [vmem:[%s1] sm:$0xff]
    %v72 = vld [vmem:[%s1 + $0x8] sm:$0xff]
    %v73 = vld [vmem:[%s1 + $0x10] sm:$0xff]
    %v74 = vld [vmem:[%s1 + $0x18] sm:$0xff]
    %v75 = vld [vmem:[%s2] sm:$0x1]
    %v77 = vlaneseq
    %v78 = vshrl.u32 %v77, 7
    %v79 = vsub.s32 0, %v78
    %v80 = vrot.slane %v75, %v79
    %v90 = vlaneseq
    %v91 = vand.u32 %v90, 127
    %v92 = vlaneseq
    %v93 = vshrl.u32 %v92, 7
    %v94 = vsub.s32 %v91, %v93
    %v95 = vrot.slane %v63, %v94
    %v96 = vadd.s32 %v91, 4294967288
    %v97 = vlaneseq
    %v98 = vshrl.u32 %v97, 7
    %v99 = vsub.s32 %v96, %v98
    %v100 = vrot.slane %v64, %v99
    %vm101 = vcmask 130112
    %v102 = vsel %vm101, %v100, %v95
    %v103 = vadd.s32 %v91, 4294967280
    %v104 = vlaneseq
    %v105 = vshrl.u32 %v104, 7
    %v106 = vsub.s32 %v103, %v105
    %v107 = vrot.slane %v65, %v106
    %vm108 = vcmask 195712
    %v109 = vsel %vm108, %v107, %v102
    %v110 = vadd.s32 %v91, 4294967272
    %v111 = vlaneseq
    %v112 = vshrl.u32 %v111, 7
    %v113 = vsub.s32 %v110, %v112
    %v114 = vrot.slane %v66, %v113
    %vm115 = vcmask 261312
    %v116 = vsel %vm115, %v114, %v109
    %v117 = vlaneseq
    %v118 = vshrl.u32 %v117, 7
    %v119 = vsub.s32 %v91, %v118
    %v120 = vrot.slane %v67, %v119
    %v121 = vlaneseq
    %v122 = vshrl.u32 %v121, 7
    %v123 = vsub.s32 %v96, %v122
    %v124 = vrot.slane %v68, %v123
    %v125 = vsel %vm101, %v124, %v120
    %v126 = vlaneseq
    %v127 = vshrl.u32 %v126, 7
    %v128 = vsub.s32 %v103, %v127
    %v129 = vrot.slane %v69, %v128
    %v130 = vsel %vm108, %v129, %v125
    %v131 = vlaneseq
    %v132 = vshrl.u32 %v131, 7
    %v133 = vsub.s32 %v110, %v132
    %v134 = vrot.slane %v70, %v133
    %v135 = vsel %vm115, %v134, %v130
    %vm136 = vcmask 1041409
    %v137 = vsel %vm136, %v135, %v116
    %vm138 = vcmask 261120
    %v139 = vsel %vm138, %v137, 0
    %141 = vmatprep.subr.mxu0 0.0
    %v142 = vand.u32 %v71, 4294901760
    %143 = vmatpush1.msra.mxu0 %v142
    %144 = vmatprep.subr.mxu0 0.0
    %v145 = vand.u32 %v72, 4294901760
    %146 = vmatpush1.msra.mxu0 %v145
    %147 = vmatprep.subr.mxu0 0.0
    %v148 = vand.u32 %v73, 4294901760
    %149 = vmatpush1.msra.mxu0 %v148
    %150 = vmatprep.subr.mxu0 0.0
    %v151 = vand.u32 %v74, 4294901760
    %152 = vmatpush1.msra.mxu0 %v151
    %153 = vmatprep.subr.mxu0 0.0
    %154 = vmatpush1.msra.mxu0 0.0
    %155 = vmatprep.subr.mxu0 0.0
    %156 = vmatpush1.msra.mxu0 0.0
    %157 = vmatprep.subr.mxu0 0.0
    %158 = vmatpush1.msra.mxu0 0.0
    %159 = vmatprep.subr.mxu0 0.0
    %160 = vmatpush1.msra.mxu0 0.0
    %161 = vmatprep.subr.mxu0 0.0
    %162 = vmatpush1.msra.mxu0 0.0
    %163 = vmatprep.subr.mxu0 0.0
    %164 = vmatpush1.msra.mxu0 0.0
    %165 = vmatprep.subr.mxu0 0.0
    %166 = vmatpush1.msra.mxu0 0.0
    %167 = vmatprep.subr.mxu0 0.0
    %168 = vmatpush1.msra.mxu0 0.0
    %169 = vmatprep.subr.mxu0 0.0
    %170 = vmatpush1.msra.mxu0 0.0
    %171 = vmatprep.subr.mxu0 0.0
    %172 = vmatpush1.msra.mxu0 0.0
    %173 = vmatprep.subr.mxu0 0.0
    %174 = vmatpush1.msra.mxu0 0.0
    %175 = vmatprep.subr.mxu0 0.0
    %176 = vmatpush1.msra.mxu0 0.0
    %177 = vmatprep.subr.mxu0 0.0
    %178 = vmatpush1.msra.mxu0 0.0
    %179 = vmatprep.subr.mxu0 0.0
    %180 = vmatpush1.msra.mxu0 0.0
    %181 = vmatprep.subr.mxu0 0.0
    %182 = vmatpush1.msra.mxu0 0.0
    %183 = vmatprep.subr.mxu0 0.0
    %184 = vmatpush1.msra.mxu0 0.0
    %185 = vmatprep.subr.mxu0 0.0
    %186 = vmatpush1.msra.mxu0 0.0
    %187 = vmatprep.subr.mxu0 0.0
    %188 = vmatpush1.msra.mxu0 0.0
    %189 = vmatprep.subr.mxu0 0.0
    %190 = vmatpush1.msra.mxu0 0.0
    %191 = vmatprep.subr.mxu0 0.0
    %192 = vmatpush1.msra.mxu0 0.0
    %193 = vmatprep.subr.mxu0 0.0
    %194 = vmatpush1.msra.mxu0 0.0
    %195 = vmatprep.subr.mxu0 0.0
    %196 = vmatpush1.msra.mxu0 0.0
    %197 = vmatprep.subr.mxu0 0.0
    %198 = vmatpush1.msra.mxu0 0.0
    %199 = vmatprep.subr.mxu0 0.0
    %200 = vmatpush1.msra.mxu0 0.0
    %201 = vmatprep.subr.mxu0 0.0
    %202 = vmatpush1.msra.mxu0 0.0
    %203 = vmatprep.subr.mxu0 0.0
    %204 = vmatpush1.msra.mxu0 0.0
    %205 = vmatprep.subr.mxu0 0.0
    %206 = vmatpush1.msra.mxu0 0.0
    %207 = vmatprep.subr.mxu0 0.0
    %208 = vmatpush1.msra.mxu0 0.0
    %209 = vmatprep.mubr.f32.mxu0 0.0
    %v210 = vand.u32 %v139, 4294901760
    %v211 = vsub.f32 %v139, %v210
    %v212 = vand.u32 %v211, 4294901760
    %v213 = vsub.f32 %v211, %v212
    %v214 = vand.u32 %v213, 4294901760
    %215 = vmatmul.mubr.f32.gmra.mrb[0].mxu0 %v214
    %v216 = vpop.f32.mrb[0].mxu0
    %v217 = vadd.f32 %v80, %v216
    %v218 = vpop.f32.mrb[0].mxu0
    %219 = vdwg.mxu0
    %220 = vmatprep.subr.mxu0 0.0
    %v221 = vand.u32 %v71, 4294901760
    %v222 = vsub.f32 %v71, %v221
    %v223 = vand.u32 %v222, 4294901760
    %v224 = vsub.f32 %v222, %v223
    %v225 = vand.u32 %v224, 4294901760
    %226 = vmatpush1.msra.mxu0 %v225
    %227 = vmatprep.subr.mxu0 0.0
    %v228 = vand.u32 %v72, 4294901760
    %v229 = vsub.f32 %v72, %v228
    %v230 = vand.u32 %v229, 4294901760
    %v231 = vsub.f32 %v229, %v230
    %v232 = vand.u32 %v231, 4294901760
    %233 = vmatpush1.msra.mxu0 %v232
    %234 = vmatprep.subr.mxu0 0.0
    %v235 = vand.u32 %v73, 4294901760
    %v236 = vsub.f32 %v73, %v235
    %v237 = vand.u32 %v236, 4294901760
    %v238 = vsub.f32 %v236, %v237
    %v239 = vand.u32 %v238, 4294901760
    %240 = vmatpush1.msra.mxu0 %v239
    %241 = vmatprep.subr.mxu0 0.0
    %v242 = vand.u32 %v74, 4294901760
    %v243 = vsub.f32 %v74, %v242
    %v244 = vand.u32 %v243, 4294901760
    %v245 = vsub.f32 %v243, %v244
    %v246 = vand.u32 %v245, 4294901760
    %247 = vmatpush1.msra.mxu0 %v246
    %248 = vmatprep.subr.mxu0 0.0
    %249 = vmatpush1.msra.mxu0 0.0
    %250 = vmatprep.subr.mxu0 0.0
    %251 = vmatpush1.msra.mxu0 0.0
    %252 = vmatprep.subr.mxu0 0.0
    %253 = vmatpush1.msra.mxu0 0.0
    %254 = vmatprep.subr.mxu0 0.0
    %255 = vmatpush1.msra.mxu0 0.0
    %256 = vmatprep.subr.mxu0 0.0
    %257 = vmatpush1.msra.mxu0 0.0
    %258 = vmatprep.subr.mxu0 0.0
    %259 = vmatpush1.msra.mxu0 0.0
    %260 = vmatprep.subr.mxu0 0.0
    %261 = vmatpush1.msra.mxu0 0.0
    %262 = vmatprep.subr.mxu0 0.0
    %263 = vmatpush1.msra.mxu0 0.0
    %264 = vmatprep.subr.mxu0 0.0
    %265 = vmatpush1.msra.mxu0 0.0
    %266 = vmatprep.subr.mxu0 0.0
    %267 = vmatpush1.msra.mxu0 0.0
    %268 = vmatprep.subr.mxu0 0.0
    %269 = vmatpush1.msra.mxu0 0.0
    %270 = vmatprep.subr.mxu0 0.0
    %271 = vmatpush1.msra.mxu0 0.0
    %272 = vmatprep.subr.mxu0 0.0
    %273 = vmatpush1.msra.mxu0 0.0
    %274 = vmatprep.subr.mxu0 0.0
    %275 = vmatpush1.msra.mxu0 0.0
    %276 = vmatprep.subr.mxu0 0.0
    %277 = vmatpush1.msra.mxu0 0.0
    %278 = vmatprep.subr.mxu0 0.0
    %279 = vmatpush1.msra.mxu0 0.0
    %280 = vmatprep.subr.mxu0 0.0
    %281 = vmatpush1.msra.mxu0 0.0
    %282 = vmatprep.subr.mxu0 0.0
    %283 = vmatpush1.msra.mxu0 0.0
    %284 = vmatprep.subr.mxu0 0.0
    %285 = vmatpush1.msra.mxu0 0.0
    %286 = vmatprep.subr.mxu0 0.0
    %287 = vmatpush1.msra.mxu0 0.0
    %288 = vmatprep.subr.mxu0 0.0
    %289 = vmatpush1.msra.mxu0 0.0
    %290 = vmatprep.subr.mxu0 0.0
    %291 = vmatpush1.msra.mxu0 0.0
    %292 = vmatprep.subr.mxu0 0.0
    %293 = vmatpush1.msra.mxu0 0.0
    %294 = vmatprep.subr.mxu0 0.0
    %295 = vmatpush1.msra.mxu0 0.0
    %296 = vmatprep.subr.mxu0 0.0
    %297 = vmatpush1.msra.mxu0 0.0
    %298 = vmatprep.subr.mxu0 0.0
    %299 = vmatpush1.msra.mxu0 0.0
    %300 = vmatprep.subr.mxu0 0.0
    %301 = vmatpush1.msra.mxu0 0.0
    %302 = vmatprep.subr.mxu0 0.0
    %303 = vmatpush1.msra.mxu0 0.0
    %304 = vmatprep.mubr.f32.mxu0 0.0
    %v305 = vand.u32 %v139, 4294901760
    %306 = vmatmul.mubr.f32.gmra.mrb[0].mxu0 %v305
    %v307 = vpop.f32.mrb[0].mxu0
    %v308 = vadd.f32 %v217, %v307
    %v309 = vpop.f32.mrb[0].mxu0
    %310 = vdwg.mxu0
    %311 = vmatprep.subr.mxu0 0.0
    %v312 = vand.u32 %v71, 4294901760
    %v313 = vsub.f32 %v71, %v312
    %314 = vmatpush1.msra.mxu0 %v313
    %315 = vmatprep.subr.mxu0 0.0
    %v316 = vand.u32 %v72, 4294901760
    %v317 = vsub.f32 %v72, %v316
    %318 = vmatpush1.msra.mxu0 %v317
    %319 = vmatprep.subr.mxu0 0.0
    %v320 = vand.u32 %v73, 4294901760
    %v321 = vsub.f32 %v73, %v320
    %322 = vmatpush1.msra.mxu0 %v321
    %323 = vmatprep.subr.mxu0 0.0
    %v324 = vand.u32 %v74, 4294901760
    %v325 = vsub.f32 %v74, %v324
    %326 = vmatpush1.msra.mxu0 %v325
    %327 = vmatprep.subr.mxu0 0.0
    %328 = vmatpush1.msra.mxu0 0.0
    %329 = vmatprep.subr.mxu0 0.0
    %330 = vmatpush1.msra.mxu0 0.0
    %331 = vmatprep.subr.mxu0 0.0
    %332 = vmatpush1.msra.mxu0 0.0
    %333 = vmatprep.subr.mxu0 0.0
    %334 = vmatpush1.msra.mxu0 0.0
    %335 = vmatprep.subr.mxu0 0.0
    %336 = vmatpush1.msra.mxu0 0.0
    %337 = vmatprep.subr.mxu0 0.0
    %338 = vmatpush1.msra.mxu0 0.0
    %339 = vmatprep.subr.mxu0 0.0
    %340 = vmatpush1.msra.mxu0 0.0
    %341 = vmatprep.subr.mxu0 0.0
    %342 = vmatpush1.msra.mxu0 0.0
    %343 = vmatprep.subr.mxu0 0.0
    %344 = vmatpush1.msra.mxu0 0.0
    %345 = vmatprep.subr.mxu0 0.0
    %346 = vmatpush1.msra.mxu0 0.0
    %347 = vmatprep.subr.mxu0 0.0
    %348 = vmatpush1.msra.mxu0 0.0
    %349 = vmatprep.subr.mxu0 0.0
    %350 = vmatpush1.msra.mxu0 0.0
    %351 = vmatprep.subr.mxu0 0.0
    %352 = vmatpush1.msra.mxu0 0.0
    %353 = vmatprep.subr.mxu0 0.0
    %354 = vmatpush1.msra.mxu0 0.0
    %355 = vmatprep.subr.mxu0 0.0
    %356 = vmatpush1.msra.mxu0 0.0
    %357 = vmatprep.subr.mxu0 0.0
    %358 = vmatpush1.msra.mxu0 0.0
    %359 = vmatprep.subr.mxu0 0.0
    %360 = vmatpush1.msra.mxu0 0.0
    %361 = vmatprep.subr.mxu0 0.0
    %362 = vmatpush1.msra.mxu0 0.0
    %363 = vmatprep.subr.mxu0 0.0
    %364 = vmatpush1.msra.mxu0 0.0
    %365 = vmatprep.subr.mxu0 0.0
    %366 = vmatpush1.msra.mxu0 0.0
    %367 = vmatprep.subr.mxu0 0.0
    %368 = vmatpush1.msra.mxu0 0.0
    %369 = vmatprep.subr.mxu0 0.0
    %370 = vmatpush1.msra.mxu0 0.0
    %371 = vmatprep.subr.mxu0 0.0
    %372 = vmatpush1.msra.mxu0 0.0
    %373 = vmatprep.subr.mxu0 0.0
    %374 = vmatpush1.msra.mxu0 0.0
    %375 = vmatprep.subr.mxu0 0.0
    %376 = vmatpush1.msra.mxu0 0.0
    %377 = vmatprep.subr.mxu0 0.0
    %378 = vmatpush1.msra.mxu0 0.0
    %379 = vmatprep.subr.mxu0 0.0
    %380 = vmatpush1.msra.mxu0 0.0
    %381 = vmatprep.subr.mxu0 0.0
    %382 = vmatpush1.msra.mxu0 0.0
    %383 = vmatprep.mubr.f32.mxu0 0.0
    %v384 = vand.u32 %v139, 4294901760
    %v385 = vsub.f32 %v139, %v384
    %386 = vmatmul.mubr.f32.gmra.mrb[0].mxu0 %v385
    %v387 = vpop.f32.mrb[0].mxu0
    %v388 = vadd.f32 %v308, %v387
    %v389 = vpop.f32.mrb[0].mxu0
    %390 = vdwg.mxu0
    %391 = vmatprep.subr.mxu0 0.0
    %v392 = vand.u32 %v71, 4294901760
    %393 = vmatpush1.msra.mxu0 %v392
    %394 = vmatprep.subr.mxu0 0.0
    %v395 = vand.u32 %v72, 4294901760
    %396 = vmatpush1.msra.mxu0 %v395
    %397 = vmatprep.subr.mxu0 0.0
    %v398 = vand.u32 %v73, 4294901760
    %399 = vmatpush1.msra.mxu0 %v398
    %400 = vmatprep.subr.mxu0 0.0
    %v401 = vand.u32 %v74, 4294901760
    %402 = vmatpush1.msra.mxu0 %v401
    %403 = vmatprep.subr.mxu0 0.0
    %404 = vmatpush1.msra.mxu0 0.0
    %405 = vmatprep.subr.mxu0 0.0
    %406 = vmatpush1.msra.mxu0 0.0
    %407 = vmatprep.subr.mxu0 0.0
    %408 = vmatpush1.msra.mxu0 0.0
    %409 = vmatprep.subr.mxu0 0.0
    %410 = vmatpush1.msra.mxu0 0.0
    %411 = vmatprep.subr.mxu0 0.0
    %412 = vmatpush1.msra.mxu0 0.0
    %413 = vmatprep.subr.mxu0 0.0
    %414 = vmatpush1.msra.mxu0 0.0
    %415 = vmatprep.subr.mxu0 0.0
    %416 = vmatpush1.msra.mxu0 0.0
    %417 = vmatprep.subr.mxu0 0.0
    %418 = vmatpush1.msra.mxu0 0.0
    %419 = vmatprep.subr.mxu0 0.0
    %420 = vmatpush1.msra.mxu0 0.0
    %421 = vmatprep.subr.mxu0 0.0
    %422 = vmatpush1.msra.mxu0 0.0
    %423 = vmatprep.subr.mxu0 0.0
    %424 = vmatpush1.msra.mxu0 0.0
    %425 = vmatprep.subr.mxu0 0.0
    %426 = vmatpush1.msra.mxu0 0.0
    %427 = vmatprep.subr.mxu0 0.0
    %428 = vmatpush1.msra.mxu0 0.0
    %429 = vmatprep.subr.mxu0 0.0
    %430 = vmatpush1.msra.mxu0 0.0
    %431 = vmatprep.subr.mxu0 0.0
    %432 = vmatpush1.msra.mxu0 0.0
    %433 = vmatprep.subr.mxu0 0.0
    %434 = vmatpush1.msra.mxu0 0.0
    %435 = vmatprep.subr.mxu0 0.0
    %436 = vmatpush1.msra.mxu0 0.0
    %437 = vmatprep.subr.mxu0 0.0
    %438 = vmatpush1.msra.mxu0 0.0
    %439 = vmatprep.subr.mxu0 0.0
    %440 = vmatpush1.msra.mxu0 0.0
    %441 = vmatprep.subr.mxu0 0.0
    %442 = vmatpush1.msra.mxu0 0.0
    %443 = vmatprep.subr.mxu0 0.0
    %444 = vmatpush1.msra.mxu0 0.0
    %445 = vmatprep.subr.mxu0 0.0
    %446 = vmatpush1.msra.mxu0 0.0
    %447 = vmatprep.subr.mxu0 0.0
    %448 = vmatpush1.msra.mxu0 0.0
    %449 = vmatprep.subr.mxu0 0.0
    %450 = vmatpush1.msra.mxu0 0.0
    %451 = vmatprep.subr.mxu0 0.0
    %452 = vmatpush1.msra.mxu0 0.0
    %453 = vmatprep.subr.mxu0 0.0
    %454 = vmatpush1.msra.mxu0 0.0
    %455 = vmatprep.subr.mxu0 0.0
    %456 = vmatpush1.msra.mxu0 0.0
    %457 = vmatprep.subr.mxu0 0.0
    %458 = vmatpush1.msra.mxu0 0.0
    %459 = vmatprep.mubr.f32.mxu0 0.0
    %v460 = vand.u32 %v139, 4294901760
    %v461 = vsub.f32 %v139, %v460
    %v462 = vand.u32 %v461, 4294901760
    %463 = vmatmul.mubr.f32.gmra.mrb[0].mxu0 %v462
    %v464 = vpop.f32.mrb[0].mxu0
    %v465 = vadd.f32 %v388, %v464
    %v466 = vpop.f32.mrb[0].mxu0
    %467 = vdwg.mxu0
    %468 = vmatprep.subr.mxu0 0.0
    %v469 = vand.u32 %v71, 4294901760
    %v470 = vsub.f32 %v71, %v469
    %v471 = vand.u32 %v470, 4294901760
    %472 = vmatpush1.msra.mxu0 %v471
    %473 = vmatprep.subr.mxu0 0.0
    %v474 = vand.u32 %v72, 4294901760
    %v475 = vsub.f32 %v72, %v474
    %v476 = vand.u32 %v475, 4294901760
    %477 = vmatpush1.msra.mxu0 %v476
    %478 = vmatprep.subr.mxu0 0.0
    %v479 = vand.u32 %v73, 4294901760
    %v480 = vsub.f32 %v73, %v479
    %v481 = vand.u32 %v480, 4294901760
    %482 = vmatpush1.msra.mxu0 %v481
    %483 = vmatprep.subr.mxu0 0.0
    %v484 = vand.u32 %v74, 4294901760
    %v485 = vsub.f32 %v74, %v484
    %v486 = vand.u32 %v485, 4294901760
    %487 = vmatpush1.msra.mxu0 %v486
    %488 = vmatprep.subr.mxu0 0.0
    %489 = vmatpush1.msra.mxu0 0.0
    %490 = vmatprep.subr.mxu0 0.0
    %491 = vmatpush1.msra.mxu0 0.0
    %492 = vmatprep.subr.mxu0 0.0
    %493 = vmatpush1.msra.mxu0 0.0
    %494 = vmatprep.subr.mxu0 0.0
    %495 = vmatpush1.msra.mxu0 0.0
    %496 = vmatprep.subr.mxu0 0.0
    %497 = vmatpush1.msra.mxu0 0.0
    %498 = vmatprep.subr.mxu0 0.0
    %499 = vmatpush1.msra.mxu0 0.0
    %500 = vmatprep.subr.mxu0 0.0
    %501 = vmatpush1.msra.mxu0 0.0
    %502 = vmatprep.subr.mxu0 0.0
    %503 = vmatpush1.msra.mxu0 0.0
    %504 = vmatprep.subr.mxu0 0.0
    %505 = vmatpush1.msra.mxu0 0.0
    %506 = vmatprep.subr.mxu0 0.0
    %507 = vmatpush1.msra.mxu0 0.0
    %508 = vmatprep.subr.mxu0 0.0
    %509 = vmatpush1.msra.mxu0 0.0
    %510 = vmatprep.subr.mxu0 0.0
    %511 = vmatpush1.msra.mxu0 0.0
    %512 = vmatprep.subr.mxu0 0.0
    %513 = vmatpush1.msra.mxu0 0.0
    %514 = vmatprep.subr.mxu0 0.0
    %515 = vmatpush1.msra.mxu0 0.0
    %516 = vmatprep.subr.mxu0 0.0
    %517 = vmatpush1.msra.mxu0 0.0
    %518 = vmatprep.subr.mxu0 0.0
    %519 = vmatpush1.msra.mxu0 0.0
    %520 = vmatprep.subr.mxu0 0.0
    %521 = vmatpush1.msra.mxu0 0.0
    %522 = vmatprep.subr.mxu0 0.0
    %523 = vmatpush1.msra.mxu0 0.0
    %524 = vmatprep.subr.mxu0 0.0
    %525 = vmatpush1.msra.mxu0 0.0
    %526 = vmatprep.subr.mxu0 0.0
    %527 = vmatpush1.msra.mxu0 0.0
    %528 = vmatprep.subr.mxu0 0.0
    %529 = vmatpush1.msra.mxu0 0.0
    %530 = vmatprep.subr.mxu0 0.0
    %531 = vmatpush1.msra.mxu0 0.0
    %532 = vmatprep.subr.mxu0 0.0
    %533 = vmatpush1.msra.mxu0 0.0
    %534 = vmatprep.subr.mxu0 0.0
    %535 = vmatpush1.msra.mxu0 0.0
    %536 = vmatprep.subr.mxu0 0.0
    %537 = vmatpush1.msra.mxu0 0.0
    %538 = vmatprep.subr.mxu0 0.0
    %539 = vmatpush1.msra.mxu0 0.0
    %540 = vmatprep.subr.mxu0 0.0
    %541 = vmatpush1.msra.mxu0 0.0
    %542 = vmatprep.subr.mxu0 0.0
    %543 = vmatpush1.msra.mxu0 0.0
    %544 = vmatprep.mubr.f32.mxu0 0.0
    %v545 = vand.u32 %v139, 4294901760
    %546 = vmatmul.mubr.f32.gmra.mrb[0].mxu0 %v545
    %v547 = vpop.f32.mrb[0].mxu0
    %v548 = vadd.f32 %v465, %v547
    %v549 = vpop.f32.mrb[0].mxu0
    %550 = vdwg.mxu0
    %551 = vmatprep.subr.mxu0 0.0
    %v552 = vand.u32 %v71, 4294901760
    %553 = vmatpush1.msra.mxu0 %v552
    %554 = vmatprep.subr.mxu0 0.0
    %v555 = vand.u32 %v72, 4294901760
    %556 = vmatpush1.msra.mxu0 %v555
    %557 = vmatprep.subr.mxu0 0.0
    %v558 = vand.u32 %v73, 4294901760
    %559 = vmatpush1.msra.mxu0 %v558
    %560 = vmatprep.subr.mxu0 0.0
    %v561 = vand.u32 %v74, 4294901760
    %562 = vmatpush1.msra.mxu0 %v561
    %563 = vmatprep.subr.mxu0 0.0
    %564 = vmatpush1.msra.mxu0 0.0
    %565 = vmatprep.subr.mxu0 0.0
    %566 = vmatpush1.msra.mxu0 0.0
    %567 = vmatprep.subr.mxu0 0.0
    %568 = vmatpush1.msra.mxu0 0.0
    %569 = vmatprep.subr.mxu0 0.0
    %570 = vmatpush1.msra.mxu0 0.0
    %571 = vmatprep.subr.mxu0 0.0
    %572 = vmatpush1.msra.mxu0 0.0
    %573 = vmatprep.subr.mxu0 0.0
    %574 = vmatpush1.msra.mxu0 0.0
    %575 = vmatprep.subr.mxu0 0.0
    %576 = vmatpush1.msra.mxu0 0.0
    %577 = vmatprep.subr.mxu0 0.0
    %578 = vmatpush1.msra.mxu0 0.0
    %579 = vmatprep.subr.mxu0 0.0
    %580 = vmatpush1.msra.mxu0 0.0
    %581 = vmatprep.subr.mxu0 0.0
    %582 = vmatpush1.msra.mxu0 0.0
    %583 = vmatprep.subr.mxu0 0.0
    %584 = vmatpush1.msra.mxu0 0.0
    %585 = vmatprep.subr.mxu0 0.0
    %586 = vmatpush1.msra.mxu0 0.0
    %587 = vmatprep.subr.mxu0 0.0
    %588 = vmatpush1.msra.mxu0 0.0
    %589 = vmatprep.subr.mxu0 0.0
    %590 = vmatpush1.msra.mxu0 0.0
    %591 = vmatprep.subr.mxu0 0.0
    %592 = vmatpush1.msra.mxu0 0.0
    %593 = vmatprep.subr.mxu0 0.0
    %594 = vmatpush1.msra.mxu0 0.0
    %595 = vmatprep.subr.mxu0 0.0
    %596 = vmatpush1.msra.mxu0 0.0
    %597 = vmatprep.subr.mxu0 0.0
    %598 = vmatpush1.msra.mxu0 0.0
    %599 = vmatprep.subr.mxu0 0.0
    %600 = vmatpush1.msra.mxu0 0.0
    %601 = vmatprep.subr.mxu0 0.0
    %602 = vmatpush1.msra.mxu0 0.0
    %603 = vmatprep.subr.mxu0 0.0
    %604 = vmatpush1.msra.mxu0 0.0
    %605 = vmatprep.subr.mxu0 0.0
    %606 = vmatpush1.msra.mxu0 0.0
    %607 = vmatprep.subr.mxu0 0.0
    %608 = vmatpush1.msra.mxu0 0.0
    %609 = vmatprep.subr.mxu0 0.0
    %610 = vmatpush1.msra.mxu0 0.0
    %611 = vmatprep.subr.mxu0 0.0
    %612 = vmatpush1.msra.mxu0 0.0
    %613 = vmatprep.subr.mxu0 0.0
    %614 = vmatpush1.msra.mxu0 0.0
    %615 = vmatprep.subr.mxu0 0.0
    %616 = vmatpush1.msra.mxu0 0.0
    %617 = vmatprep.subr.mxu0 0.0
    %618 = vmatpush1.msra.mxu0 0.0
    %619 = vmatprep.mubr.f32.mxu0 0.0
    %v620 = vand.u32 %v139, 4294901760
    %621 = vmatmul.mubr.f32.gmra.mrb[0].mxu0 %v620
    %v622 = vpop.f32.mrb[0].mxu0
    %v623 = vadd.f32 %v548, %v622
    %v624 = vpop.f32.mrb[0].mxu0
    %625 = vdwg.mxu0
    %vm626 = vcmask 25600
    %627 = vst.msk [vmem:[#allocation5] sm:$0x3] %vm626, %v623
    // Predicated region
    $region18: #{tpu_custom_call.1} parent=1 // pred_check
      _
    $region19: #{tpu_custom_call.1} parent=1 // pred_check_branch
      %629 = sbr.rel (0) target = $region21
    $region20: #{tpu_custom_call.1} parent=1 // pred_region
      %s631 = ssub.s32 32, 32
      %632 = vsyncadd [#allocation4], %s631
      %s634 = sshll.u32 [#allocation5], 4
      %s635 = int_to_ptr.vmem [resolvable:$true] %s634
      %637 = dma.vmem_to_hbm [thread:$0]  %s635, 32, %s3, [#allocation4]
    $region21: #{tpu_custom_call.1} parent=1 // pred_fallthru
      _
    // Predicated region
    $region22: #{tpu_custom_call.1} parent=1 // pred_check
      _
    $region23: #{tpu_custom_call.1} parent=1 // pred_check_branch
      %639 = sbr.rel (0) target = $region25
    $region24: #{tpu_custom_call.1} parent=1 // pred_region
      %640 = dma.done [#allocation4], 32
    $region25: #{tpu_custom_call.1} parent=1 // pred_fallthru
      _
    %641 = vsyncpa [#allocation3], 1
    %642 = vsyncpa [#allocation4], 1

</llo_original>
